<compile_context>
chip_gen: v7x
topology: tpu7x:2x2x1
jax: 0.10.0
libtpu: 0.0.40
codegen_flags: <defaults>
</compile_context>

<pallas_src>
import functools

import jax
import jax.numpy as jnp
from jax.experimental import pallas as pl
from jax.experimental.pallas import tpu as pltpu

CMAP_CHANNELS = 4
PAF_CHANNELS = 8
OUT_CHANNELS = CMAP_CHANNELS + PAF_CHANNELS


def _fused_head_kernel(x_ref, w_ref, paf_ref, cmap_ref, stk_ref, *, wp):
    """Fused 3x3 conv head (+bias) + channel split for one image.

    x_ref:    (1, C, Lflat) bf16, Lflat = (H+3)*wp, wp = W+2 — zero-padded image,
              rows flattened row-major (1 top pad row, 2 bottom pad rows).
    w_ref:    (OUT, 9*C+1)  bf16 — columns ordered (dy, dx, c); last column = bias.
              Rows are paf-first (8) then cmap (4).
    paf_ref:  (1, 8, La) bf16, cmap_ref: (1, 4, La) bf16, La = H*wp.
    stk_ref:  (9*C+1, La) bf16 VMEM scratch — stacked im2col operand + ones row.
    Output lane j maps to (h = j // wp, w = j % wp); lanes with w >= W are junk from
    the flat-shift trick and are dropped by the wrapper slice.
    """
    c = x_ref.shape[1]
    la = paf_ref.shape[2]

    # Stage the nine lane-shifted tap windows (and the bias-carrier ones row) into the
    # persistent scratch; the single matmul below then accumulates all 9*C+1 contraction
    # rows inside the MXU instead of 9 dots + 8 VMEM accumulator passes.
    for dy in range(3):
        for dx in range(3):
            t = dy * 3 + dx
            off = dy * wp + dx                       # static flat offset of this tap
            stk_ref[pl.ds(t * c, c), :] = x_ref[0, :, pl.ds(off, la)]
    stk_ref[pl.ds(9 * c, 1), :] = jnp.ones((1, la), dtype=stk_ref.dtype)

    # One MXU pass: (OUT, 9C+1) @ (9C+1, La) -> (OUT, La), f32 accumulation.
    acc = jnp.dot(w_ref[...], stk_ref[...], preferred_element_type=jnp.float32)

    # torch.split(..., [cmap, paf], dim=1): channels were reordered paf-first in the
    # wrapper so both slices start on an 8-sublane boundary (tile-aligned stores).
    paf_ref[0] = acc[:PAF_CHANNELS, :].astype(paf_ref.dtype)
    cmap_ref[0] = acc[PAF_CHANNELS:, :].astype(cmap_ref.dtype)


@jax.jit
def dla_wrapper_forward(x, weight, bias):
    """x: (N, C, H, W) NCHW f32; weight: (OUT, C, 3, 3) f32; bias: (OUT,) f32."""
    N, C, H, W = x.shape
    out_ch = weight.shape[0]
    assert out_ch == OUT_CHANNELS

    wp = W + 2                     # 1 pad column each side (dx shifts)
    la = H * wp                    # per-image lane-dense output length
    lflat = (H + 3) * wp           # 1 top + 2 bottom pad rows keep all 9 tap slices
    kdim = 9 * C + 1               # 9 taps x C channels + bias-carrier row

    # bf16 streams (memory-bound head), f32 accumulation inside the MXU.
    xq = x.astype(jnp.bfloat16)
    xp = jnp.pad(xq, ((0, 0), (0, 0), (1, 2), (1, 1)))      # (N, C, H+3, W+2)
    xflat = xp.reshape(N, C, lflat)                         # free row-major merge

    # paf-first channel order so the in-kernel split lands on an 8-sublane boundary;
    # fold bias in as the last GEMM column (multiplied by the ones row in the kernel).
    w_r = jnp.concatenate([weight[CMAP_CHANNELS:], weight[:CMAP_CHANNELS]], axis=0)
    b_r = jnp.concatenate([bias[CMAP_CHANNELS:], bias[:CMAP_CHANNELS]], axis=0)
    w_flat = jnp.transpose(w_r, (0, 2, 3, 1)).reshape(out_ch, 9 * C)   # (OUT, 9C)
    w_aug = jnp.concatenate([w_flat, b_r.reshape(out_ch, 1)],
                            axis=1).astype(jnp.bfloat16)               # (OUT, 9C+1)

    # VMEM budget: double-buffered input/output/weight blocks + single-copy scratch.
    bytes_in = C * lflat * 2
    bytes_out = out_ch * la * 2
    bytes_w = out_ch * kdim * 2
    bytes_scratch = kdim * la * 2
    working = 2 * (bytes_in + bytes_out + bytes_w) + bytes_scratch
    vmem_limit = int(min(48 * 2**20, max(16 * 2**20, 2 * working)))

    cost = pl.CostEstimate(
        flops=2 * N * out_ch * kdim * la,
        transcendentals=0,
        bytes_accessed=int(N * C * lflat * 2 + out_ch * kdim * 2
                           + N * out_ch * la * 2))

    paf_flat, cmap_flat = pl.pallas_call(
        functools.partial(_fused_head_kernel, wp=wp),
        out_shape=(jax.ShapeDtypeStruct((N, PAF_CHANNELS, la), jnp.bfloat16),
                   jax.ShapeDtypeStruct((N, CMAP_CHANNELS, la), jnp.bfloat16)),
        grid_spec=pltpu.PrefetchScalarGridSpec(
            num_scalar_prefetch=0,
            grid=(N,),                                      # one image per step
            in_specs=[
                pl.BlockSpec((1, C, lflat), lambda n: (n, 0, 0)),
                # ~1 KiB weight block: double-buffering it is negligible VMEM.
                pl.BlockSpec((out_ch, kdim), lambda n: (0, 0)),
            ],
            out_specs=(
                pl.BlockSpec((1, PAF_CHANNELS, la), lambda n: (n, 0, 0)),
                pl.BlockSpec((1, CMAP_CHANNELS, la), lambda n: (n, 0, 0)),
            ),
            scratch_shapes=[pltpu.VMEM((kdim, la), jnp.bfloat16)],
        ),
        compiler_params=pltpu.CompilerParams(
            dimension_semantics=("parallel",),
            vmem_limit_bytes=vmem_limit),
        cost_estimate=cost,
    )(xflat, w_aug)

    # (N, ch, H*(W+2)) -> (N, ch, H, W+2) is a free reshape; the single slice copy drops
    # the 2 junk columns per row and upcasts to f32 in the same pass.
    paf = paf_flat.reshape(N, PAF_CHANNELS, H, wp)[:, :, :, :W].astype(jnp.float32)
    cmap = cmap_flat.reshape(N, CMAP_CHANNELS, H, wp)[:, :, :, :W].astype(jnp.float32)
    return cmap, paf


def _reference(x, weight, bias):
    y = jax.lax.conv_general_dilated(
        x, weight, window_strides=(1, 1), padding="SAME",
        dimension_numbers=("NCHW", "OIHW", "NCHW"))
    y = y + bias.reshape(1, -1, 1, 1)
    return y[:, :CMAP_CHANNELS], y[:, CMAP_CHANNELS:]


if __name__ == "__main__":
    key = jax.random.PRNGKey(0)
    kx, kw, kb = jax.random.split(key, 3)

    N, C, H, W = 2, 4, 16, 16
    x = jax.random.normal(kx, (N, C, H, W), dtype=jnp.float32)
    # deterministic synthetic backbone-head parameters
    weight = 0.1 * jax.random.normal(kw, (OUT_CHANNELS, C, 3, 3), dtype=jnp.float32)
    bias = 0.01 * jax.random.normal(kb, (OUT_CHANNELS,), dtype=jnp.float32)

    cmap, paf = dla_wrapper_forward(x, weight, bias)
    jax.block_until_ready((cmap, paf))

    assert cmap.shape == (N, CMAP_CHANNELS, H, W)
    assert paf.shape == (N, PAF_CHANNELS, H, W)
    assert cmap.dtype == jnp.float32 and paf.dtype == jnp.float32

    # Tight check: reference on the same bf16-quantized operands, with output rounded
    # through bf16 like the kernel, so only f32 accumulation order differs.
    xq = x.astype(jnp.bfloat16).astype(jnp.float32)
    wq = weight.astype(jnp.bfloat16).astype(jnp.float32)
    bq = bias.astype(jnp.bfloat16).astype(jnp.float32)
    cmap_q, paf_q = _reference(xq, wq, bq)
    cmap_q = cmap_q.astype(jnp.bfloat16).astype(jnp.float32)
    paf_q = paf_q.astype(jnp.bfloat16).astype(jnp.float32)
    assert jnp.allclose(cmap, cmap_q, atol=2e-2, rtol=2e-2)
    assert jnp.allclose(paf, paf_q, atol=2e-2, rtol=2e-2)

    # Loose check against the full-f32 reference (covers bf16 quantization error).
    cmap_f, paf_f = _reference(x, weight, bias)
    assert jnp.allclose(cmap, cmap_f, atol=6e-2, rtol=6e-2)
    assert jnp.allclose(paf, paf_f, atol=6e-2, rtol=6e-2)

    print("KERNEL_OK")
</pallas_src>

<mosaic_0001>
module attributes {stable_mosaic.version = 11 : i64} {
  func.func @_fused_head_kernel(%arg0: i32, %arg1: memref<1x4x342xbf16, #tpu.memory_space<vmem>>, %arg2: memref<12x37xbf16, #tpu.memory_space<vmem>>, %arg3: memref<1x8x288xbf16, #tpu.memory_space<vmem>>, %arg4: memref<1x4x288xbf16, #tpu.memory_space<vmem>>, %arg5: memref<37x288xbf16, #tpu.memory_space<vmem>>) attributes {dimension_semantics = [#tpu.dimension_semantics<parallel>], iteration_bounds = array<i64: 2>, scalar_prefetch = 0 : i64, scratch_operands = 1 : i64, tpu.core_type = #tpu.core_type<tc>, window_params = [{transform_indices = @transform_0, window_bounds = array<i64: 1, 4, 342>}, {pipeline_mode = #tpu.pipeline_mode<synchronous>, transform_indices = @transform_1, window_bounds = array<i64: 12, 37>}, {transform_indices = @transform_2, window_bounds = array<i64: 1, 8, 288>}, {transform_indices = @transform_3, window_bounds = array<i64: 1, 4, 288>}]} {
    %c0 = arith.constant 0 : index
    %c0_0 = arith.constant 0 : index
    %c0_1 = arith.constant 0 : index
    %0 = vector.load %arg1[%c0, %c0_0, %c0_1] : memref<1x4x342xbf16, #tpu.memory_space<vmem>>, vector<1x4x288xbf16>
    %1 = vector.shape_cast %0 : vector<1x4x288xbf16> to vector<4x288xbf16>
    %c0_2 = arith.constant 0 : index
    %c0_3 = arith.constant 0 : index
    %2 = vector.load %arg5[%c0_2, %c0_3] : memref<37x288xbf16, #tpu.memory_space<vmem>>, vector<4x288xbf16>
    tpu.vector_store %arg5[%c0_2, %c0_3], %1 {strides = array<i32>} : memref<37x288xbf16, #tpu.memory_space<vmem>>, vector<4x288xbf16>,
    %c0_4 = arith.constant 0 : index
    %c0_5 = arith.constant 0 : index
    %c1 = arith.constant 1 : index
    %3 = vector.load %arg1[%c0_4, %c0_5, %c1] : memref<1x4x342xbf16, #tpu.memory_space<vmem>>, vector<1x4x288xbf16>
    %4 = vector.shape_cast %3 : vector<1x4x288xbf16> to vector<4x288xbf16>
    %c4 = arith.constant 4 : index
    %c0_6 = arith.constant 0 : index
    %5 = vector.load %arg5[%c4, %c0_6] : memref<37x288xbf16, #tpu.memory_space<vmem>>, vector<4x288xbf16>
    tpu.vector_store %arg5[%c4, %c0_6], %4 {strides = array<i32>} : memref<37x288xbf16, #tpu.memory_space<vmem>>, vector<4x288xbf16>,
    %c0_7 = arith.constant 0 : index
    %c0_8 = arith.constant 0 : index
    %c2 = arith.constant 2 : index
    %6 = vector.load %arg1[%c0_7, %c0_8, %c2] : memref<1x4x342xbf16, #tpu.memory_space<vmem>>, vector<1x4x288xbf16>
    %7 = vector.shape_cast %6 : vector<1x4x288xbf16> to vector<4x288xbf16>
    %c8 = arith.constant 8 : index
    %c0_9 = arith.constant 0 : index
    %8 = vector.load %arg5[%c8, %c0_9] : memref<37x288xbf16, #tpu.memory_space<vmem>>, vector<4x288xbf16>
    tpu.vector_store %arg5[%c8, %c0_9], %7 {strides = array<i32>} : memref<37x288xbf16, #tpu.memory_space<vmem>>, vector<4x288xbf16>,
    %c0_10 = arith.constant 0 : index
    %c0_11 = arith.constant 0 : index
    %c18 = arith.constant 18 : index
    %9 = vector.load %arg1[%c0_10, %c0_11, %c18] : memref<1x4x342xbf16, #tpu.memory_space<vmem>>, vector<1x4x288xbf16>
    %10 = vector.shape_cast %9 : vector<1x4x288xbf16> to vector<4x288xbf16>
    %c12 = arith.constant 12 : index
    %c0_12 = arith.constant 0 : index
    %11 = vector.load %arg5[%c12, %c0_12] : memref<37x288xbf16, #tpu.memory_space<vmem>>, vector<4x288xbf16>
    tpu.vector_store %arg5[%c12, %c0_12], %10 {strides = array<i32>} : memref<37x288xbf16, #tpu.memory_space<vmem>>, vector<4x288xbf16>,
    %c0_13 = arith.constant 0 : index
    %c0_14 = arith.constant 0 : index
    %c19 = arith.constant 19 : index
    %12 = vector.load %arg1[%c0_13, %c0_14, %c19] : memref<1x4x342xbf16, #tpu.memory_space<vmem>>, vector<1x4x288xbf16>
    %13 = vector.shape_cast %12 : vector<1x4x288xbf16> to vector<4x288xbf16>
    %c16 = arith.constant 16 : index
    %c0_15 = arith.constant 0 : index
    %14 = vector.load %arg5[%c16, %c0_15] : memref<37x288xbf16, #tpu.memory_space<vmem>>, vector<4x288xbf16>
    tpu.vector_store %arg5[%c16, %c0_15], %13 {strides = array<i32>} : memref<37x288xbf16, #tpu.memory_space<vmem>>, vector<4x288xbf16>,
    %c0_16 = arith.constant 0 : index
    %c0_17 = arith.constant 0 : index
    %c20 = arith.constant 20 : index
    %15 = vector.load %arg1[%c0_16, %c0_17, %c20] : memref<1x4x342xbf16, #tpu.memory_space<vmem>>, vector<1x4x288xbf16>
    %16 = vector.shape_cast %15 : vector<1x4x288xbf16> to vector<4x288xbf16>
    %c20_18 = arith.constant 20 : index
    %c0_19 = arith.constant 0 : index
    %17 = vector.load %arg5[%c20_18, %c0_19] : memref<37x288xbf16, #tpu.memory_space<vmem>>, vector<4x288xbf16>
    tpu.vector_store %arg5[%c20_18, %c0_19], %16 {strides = array<i32>} : memref<37x288xbf16, #tpu.memory_space<vmem>>, vector<4x288xbf16>,
    %c0_20 = arith.constant 0 : index
    %c0_21 = arith.constant 0 : index
    %c36 = arith.constant 36 : index
    %18 = vector.load %arg1[%c0_20, %c0_21, %c36] : memref<1x4x342xbf16, #tpu.memory_space<vmem>>, vector<1x4x288xbf16>
    %19 = vector.shape_cast %18 : vector<1x4x288xbf16> to vector<4x288xbf16>
    %c24 = arith.constant 24 : index
    %c0_22 = arith.constant 0 : index
    %20 = vector.load %arg5[%c24, %c0_22] : memref<37x288xbf16, #tpu.memory_space<vmem>>, vector<4x288xbf16>
    tpu.vector_store %arg5[%c24, %c0_22], %19 {strides = array<i32>} : memref<37x288xbf16, #tpu.memory_space<vmem>>, vector<4x288xbf16>,
    %c0_23 = arith.constant 0 : index
    %c0_24 = arith.constant 0 : index
    %c37 = arith.constant 37 : index
    %21 = vector.load %arg1[%c0_23, %c0_24, %c37] : memref<1x4x342xbf16, #tpu.memory_space<vmem>>, vector<1x4x288xbf16>
    %22 = vector.shape_cast %21 : vector<1x4x288xbf16> to vector<4x288xbf16>
    %c28 = arith.constant 28 : index
    %c0_25 = arith.constant 0 : index
    %23 = vector.load %arg5[%c28, %c0_25] : memref<37x288xbf16, #tpu.memory_space<vmem>>, vector<4x288xbf16>
    tpu.vector_store %arg5[%c28, %c0_25], %22 {strides = array<i32>} : memref<37x288xbf16, #tpu.memory_space<vmem>>, vector<4x288xbf16>,
    %c0_26 = arith.constant 0 : index
    %c0_27 = arith.constant 0 : index
    %c38 = arith.constant 38 : index
    %24 = vector.load %arg1[%c0_26, %c0_27, %c38] : memref<1x4x342xbf16, #tpu.memory_space<vmem>>, vector<1x4x288xbf16>
    %25 = vector.shape_cast %24 : vector<1x4x288xbf16> to vector<4x288xbf16>
    %c32 = arith.constant 32 : index
    %c0_28 = arith.constant 0 : index
    %26 = vector.load %arg5[%c32, %c0_28] : memref<37x288xbf16, #tpu.memory_space<vmem>>, vector<4x288xbf16>
    tpu.vector_store %arg5[%c32, %c0_28], %25 {strides = array<i32>} : memref<37x288xbf16, #tpu.memory_space<vmem>>, vector<4x288xbf16>,
    %cst = arith.constant 1.000000e+00 : bf16
    %27 = vector.broadcast %cst : bf16 to vector<1x288xbf16>
    %c36_29 = arith.constant 36 : index
    %c0_30 = arith.constant 0 : index
    %28 = vector.load %arg5[%c36_29, %c0_30] : memref<37x288xbf16, #tpu.memory_space<vmem>>, vector<1x288xbf16>
    tpu.vector_store %arg5[%c36_29, %c0_30], %27 {strides = array<i32>} : memref<37x288xbf16, #tpu.memory_space<vmem>>, vector<1x288xbf16>,
    %c0_31 = arith.constant 0 : index
    %c0_32 = arith.constant 0 : index
    %29 = vector.load %arg2[%c0_31, %c0_32] : memref<12x37xbf16, #tpu.memory_space<vmem>>, vector<12x37xbf16>
    %c0_33 = arith.constant 0 : index
    %c0_34 = arith.constant 0 : index
    %30 = vector.load %arg5[%c0_33, %c0_34] : memref<37x288xbf16, #tpu.memory_space<vmem>>, vector<37x288xbf16>
    %cst_35 = arith.constant dense<0.000000e+00> : vector<12x288xf32>
    %31 = tpu.matmul %29, %30, %cst_35 {dimension_numbers = #tpu.dot_dimension_numbers<[1], [0], [0], [1], [0, 0, 1, 1], [], []>} : vector<12x37xbf16>, vector<37x288xbf16>, vector<12x288xf32> -> vector<12x288xf32>
    %32 = vector.extract_strided_slice %31 {offsets = [0, 0], sizes = [8, 288], strides = [1, 1]} : vector<12x288xf32> to vector<8x288xf32>
    %33 = arith.truncf %32 : vector<8x288xf32> to vector<8x288xbf16>
    %c0_36 = arith.constant 0 : index
    %c0_37 = arith.constant 0 : index
    %c0_38 = arith.constant 0 : index
    %34 = vector.load %arg3[%c0_36, %c0_37, %c0_38] : memref<1x8x288xbf16, #tpu.memory_space<vmem>>, vector<1x8x288xbf16>
    %35 = vector.shape_cast %34 : vector<1x8x288xbf16> to vector<8x288xbf16>
    %36 = vector.shape_cast %33 : vector<8x288xbf16> to vector<1x8x288xbf16>
    tpu.vector_store %arg3[%c0_36, %c0_37, %c0_38], %36 {strides = array<i32>} : memref<1x8x288xbf16, #tpu.memory_space<vmem>>, vector<1x8x288xbf16>,
    %37 = vector.extract_strided_slice %31 {offsets = [8, 0], sizes = [4, 288], strides = [1, 1]} : vector<12x288xf32> to vector<4x288xf32>
    %38 = arith.truncf %37 : vector<4x288xf32> to vector<4x288xbf16>
    %c0_39 = arith.constant 0 : index
    %c0_40 = arith.constant 0 : index
    %c0_41 = arith.constant 0 : index
    %39 = vector.load %arg4[%c0_39, %c0_40, %c0_41] : memref<1x4x288xbf16, #tpu.memory_space<vmem>>, vector<1x4x288xbf16>
    %40 = vector.shape_cast %39 : vector<1x4x288xbf16> to vector<4x288xbf16>
    %41 = vector.shape_cast %38 : vector<4x288xbf16> to vector<1x4x288xbf16>
    tpu.vector_store %arg4[%c0_39, %c0_40, %c0_41], %41 {strides = array<i32>} : memref<1x4x288xbf16, #tpu.memory_space<vmem>>, vector<1x4x288xbf16>,
    return
  }
  func.func @transform_0(%arg0: i32) -> (i32, i32, i32) {
    %c0_i32 = arith.constant 0 : i32
    %c0_i32_0 = arith.constant 0 : i32
    %c0_i32_1 = arith.constant 0 : i32
    return %arg0, %c0_i32, %c0_i32_0 : i32, i32, i32
  }
  func.func @transform_1(%arg0: i32) -> (i32, i32) {
    %c0_i32 = arith.constant 0 : i32
    %c0_i32_0 = arith.constant 0 : i32
    %c0_i32_1 = arith.constant 0 : i32
    return %c0_i32, %c0_i32_0 : i32, i32
  }
  func.func @transform_2(%arg0: i32) -> (i32, i32, i32) {
    %c0_i32 = arith.constant 0 : i32
    %c0_i32_0 = arith.constant 0 : i32
    %c0_i32_1 = arith.constant 0 : i32
    return %arg0, %c0_i32, %c0_i32_0 : i32, i32, i32
  }
  func.func @transform_3(%arg0: i32) -> (i32, i32, i32) {
    %c0_i32 = arith.constant 0 : i32
    %c0_i32_0 = arith.constant 0 : i32
    %c0_i32_1 = arith.constant 0 : i32
    return %arg0, %c0_i32, %c0_i32_0 : i32, i32, i32
  }
}

</mosaic_0001>

<llo_original>
// kernel: dla_wrapper_forward.1
$region0: #{dla_wrapper_forward.1}
  #allocation0 [shape = 'u32[]', space=smem, size = 0x4, offset = 0x4, fixed_abs, tag = 'smem constant byte address 0x4 - core index']
  #allocation1 [shape = 'u32[144,128]{1,0:T(1,128)}', space=vmem, size = 0x12000, scoped, tag = 'internal scratch']
  #allocation2 [shape = 'bf16[37,288]{1,0:T(8,128)(2,1)}', space=vmem, size = 0x7800, scoped, tag = 'scratch operand']
  %s0 = inlined_call_operand.vmem [shape: bf16[2,4,342], index: 0, kind: input, shape index: {}]
  %s1 = inlined_call_operand.vmem [shape: bf16[12,37], index: 1, kind: input, shape index: {}]
  %s2 = inlined_call_operand.vmem [shape: bf16[2,8,288], index: 2, kind: output, shape index: {0}]
  %s3 = inlined_call_operand.vmem [shape: bf16[2,4,288], index: 3, kind: output, shape index: {1}]
  %4 = xla_tuple %s2, %s3
  %s5 = sld [smem:[#allocation0]]
  $region49: #{dla_wrapper_forward.1} parent=0
    _
  %s7 = ssub.s32 1, %s5
  %s8 = scalar_select 0, %s7, %s5
  loop: start=0, step=1, limit=4
  $region2: #{dla_wrapper_forward.1} parent=0 // loop_pre_header
    _
  $region3: #{dla_wrapper_forward.1} parent=0 // loop_header
    %s10 = sphi 0, %s14
    %p11 = scmp.ge.s32.totalorder %s10, 4
    %s20 = sphi 0, %s22
    %s23 = sphi 0, %s20
    %s24 = sphi 0, %s23
    %s40 = sphi 0, %s24
    %s44 = sphi 0, %s44
    %s46 = sphi 0, %s44
    %s47 = sphi 0, %s46
    %s61 = sphi 0, %s47
    %s67 = sphi 0, %s69
    %s70 = sphi 0, %s67
    %s71 = sphi 0, %s70
    %s87 = sphi 0, %s71
    %s93 = sphi 0, %s95
    %s96 = sphi 0, %s93
    %s97 = sphi 0, %s96
    %s113 = sphi 0, %s97
  $region4: #{dla_wrapper_forward.1} parent=0 // loop_header_branch
    %13 = sbr.rel (%p11) target = $region8
  $region5: #{dla_wrapper_forward.1} parent=0 // loop_body
    %s15 = ssub.s32 %s10, 1
    %s16 = ssub.s32 %s10, 2
    %s17 = sadd.s32 %s10, 1
    %s18 = ssub.s32 %s10, %s17
    %p19 = scmp.eq.s32.totalorder %s18, 0
    %s21 = sadd.s32 %s20, 1
    %s22 = scalar_select %p19, %s20, %s21
    %p25 = pneg %p19
    %p26 = scmp.eq.s32.totalorder %s10, 1
    %p27 = por %p25, %p26
    %p28 = scmp.ne.s32.totalorder %s20, %s23
    %p29 = scmp.eq.s32.totalorder %s10, 0
    %p30 = por %p28, %p29
    %p31 = scmp.ne.s32.totalorder %s20, %s23
    %p32 = scmp.eq.s32.totalorder %s15, 1
    %p33 = por %p31, %p32
    %p34 = scmp.ne.s32.totalorder %s23, %s24
    %p35 = scmp.eq.s32.totalorder %s15, 0
    %p36 = por %p34, %p35
    %p37 = scmp.ne.s32.totalorder %s23, %s24
    %p38 = scmp.eq.s32.totalorder %s16, 1
    %p39 = por %p37, %p38
    %p41 = scmp.ne.s32.totalorder %s24, %s40
    %p42 = scmp.eq.s32.totalorder %s16, 0
    %p43 = por %p41, %p42
    %s45 = sadd.s32 %s44, 1
    %p48 = scmp.eq.s32.totalorder %s10, 1
    %p49 = scmp.ne.s32.totalorder %s44, %s46
    %p50 = scmp.eq.s32.totalorder %s10, 0
    %p51 = por %p49, %p50
    %p52 = scmp.ne.s32.totalorder %s44, %s46
    %p53 = scmp.eq.s32.totalorder %s15, 1
    %p54 = por %p52, %p53
    %p55 = scmp.ne.s32.totalorder %s46, %s47
    %p56 = scmp.eq.s32.totalorder %s15, 0
    %p57 = por %p55, %p56
    %p58 = scmp.ne.s32.totalorder %s46, %s47
    %p59 = scmp.eq.s32.totalorder %s16, 1
    %p60 = por %p58, %p59
    %p62 = scmp.ne.s32.totalorder %s47, %s61
    %p63 = scmp.eq.s32.totalorder %s16, 0
    %p64 = por %p62, %p63
    %s65 = ssub.s32 %s10, %s17
    %p66 = scmp.eq.s32.totalorder %s65, 0
    %s68 = sadd.s32 %s67, 1
    %s69 = scalar_select %p66, %s67, %s68
    %p72 = pneg %p66
    %p73 = scmp.eq.s32.totalorder %s10, 1
    %p74 = por %p72, %p73
    %p75 = scmp.ne.s32.totalorder %s67, %s70
    %p76 = scmp.eq.s32.totalorder %s10, 0
    %p77 = por %p75, %p76
    %p78 = scmp.ne.s32.totalorder %s67, %s70
    %p79 = scmp.eq.s32.totalorder %s15, 1
    %p80 = por %p78, %p79
    %p81 = scmp.ne.s32.totalorder %s70, %s71
    %p82 = scmp.eq.s32.totalorder %s15, 0
    %p83 = por %p81, %p82
    %p84 = scmp.ne.s32.totalorder %s70, %s71
    %p85 = scmp.eq.s32.totalorder %s16, 1
    %p86 = por %p84, %p85
    %p88 = scmp.ne.s32.totalorder %s71, %s87
    %p89 = scmp.eq.s32.totalorder %s16, 0
    %p90 = por %p88, %p89
    %s91 = ssub.s32 %s10, %s17
    %p92 = scmp.eq.s32.totalorder %s91, 0
    %s94 = sadd.s32 %s93, 1
    %s95 = scalar_select %p92, %s93, %s94
    %p98 = pneg %p92
    %p99 = scmp.eq.s32.totalorder %s10, 1
    %p100 = por %p98, %p99
    %p101 = scmp.ne.s32.totalorder %s93, %s96
    %p102 = scmp.eq.s32.totalorder %s10, 0
    %p103 = por %p101, %p102
    %p104 = scmp.ne.s32.totalorder %s93, %s96
    %p105 = scmp.eq.s32.totalorder %s15, 1
    %p106 = por %p104, %p105
    %p107 = scmp.ne.s32.totalorder %s96, %s97
    %p108 = scmp.eq.s32.totalorder %s15, 0
    %p109 = por %p107, %p108
    %p110 = scmp.ne.s32.totalorder %s96, %s97
    %p111 = scmp.eq.s32.totalorder %s16, 1
    %p112 = por %p110, %p111
    %p114 = scmp.ne.s32.totalorder %s97, %s113
    %p115 = scmp.eq.s32.totalorder %s16, 0
    %p116 = por %p114, %p115
    %p117 = scmp.le.s32.totalorder 1, %s10
    %p118 = scmp.lt.s32.totalorder %s10, 3
    %p119 = pnand %p117, %p118
    %p120 = pneg %p119
    // Predicated region
    $region9: #{dla_wrapper_forward.1} parent=5 // pred_check
      _
    $region10: #{dla_wrapper_forward.1} parent=5 // pred_check_branch
      %122 = sbr.rel (%p119) target = $region12
    $region11: #{dla_wrapper_forward.1} parent=5 // pred_region
      %s123 = ssub.s32 %s10, 1
      // Predicated region
      $region13: #{dla_wrapper_forward.1} parent=11 // pred_check
        %p124 = pneg %p57
      $region14: #{dla_wrapper_forward.1} parent=11 // pred_check_branch
        %126 = sbr.rel (%p124) target = $region16
      $region15: #{dla_wrapper_forward.1} parent=11 // pred_region
        _
      $region16: #{dla_wrapper_forward.1} parent=11 // pred_fallthru
        _
    $region12: #{dla_wrapper_forward.1} parent=5 // pred_fallthru
      _
    %p127 = scmp.lt.s32.totalorder %s10, 2
    // Predicated region
    $region17: #{dla_wrapper_forward.1} parent=5 // pred_check
      %p128 = pneg %p127
    $region18: #{dla_wrapper_forward.1} parent=5 // pred_check_branch
      %130 = sbr.rel (%p128) target = $region20
    $region19: #{dla_wrapper_forward.1} parent=5 // pred_region
      // Predicated region
      $region21: #{dla_wrapper_forward.1} parent=19 // pred_check
        %p131 = pneg %p30
      $region22: #{dla_wrapper_forward.1} parent=19 // pred_check_branch
        %133 = sbr.rel (%p131) target = $region24
      $region23: #{dla_wrapper_forward.1} parent=19 // pred_region
        %p134 = scmp.lt.s32.totalorder %s10, 1
        %s135 = scalar_select %p134, %s10, 1
        %s136 = smul.addr %s135, 3
        %s137 = smul.addr %s136, 2
        %s138 = scalar_lea.vmem %s0, %s137
      $region24: #{dla_wrapper_forward.1} parent=19 // pred_fallthru
        _
    $region20: #{dla_wrapper_forward.1} parent=5 // pred_fallthru
      _
    %p139 = scmp.le.s32.totalorder 1, %s10
    %p140 = scmp.lt.s32.totalorder %s10, 3
    %p141 = pnand %p139, %p140
    %p142 = pneg %p141
    // Predicated region
    $region25: #{dla_wrapper_forward.1} parent=5 // pred_check
      _
    $region26: #{dla_wrapper_forward.1} parent=5 // pred_check_branch
      %144 = sbr.rel (%p141) target = $region28
    $region27: #{dla_wrapper_forward.1} parent=5 // pred_region
      %s145 = ssub.s32 %s10, 1
      %p146 = scmp.lt.s32.totalorder %s15, 1
      %s147 = scalar_select %p146, %s15, 1
      %s148 = smul.addr %s147, 3
      %s149 = smul.addr %s148, 2
      %s150 = scalar_lea.vmem %s0, %s149
      %p151 = pneg %p36
      %p152 = pneg %p33
      %p153 = pneg %p57
      %p154 = pneg %p54
      %p155 = pneg %p83
      %p156 = pneg %p80
      %p157 = scmp.lt.s32.totalorder %s15, 1
      %s158 = scalar_select %p157, %s15, 1
      %s159 = smul.addr %s158, 3
      %s160 = smul.addr %s159, 4
      %s161 = scalar_lea.vmem %s2, %s160
      %p162 = pneg %p109
      %p163 = pneg %p106
      %p164 = scmp.lt.s32.totalorder %s15, 1
      %s165 = scalar_select %p164, %s15, 1
      %s166 = smul.addr %s165, 3
      %s167 = smul.addr %s166, 2
      %s168 = scalar_lea.vmem %s3, %s167
      %p169 = scmp.lt.s32.totalorder %s15, 1
      %s170 = scalar_select %p169, %s15, 1
      %s171 = smul.addr %s170, 3
      %s172 = smul.addr %s171, 2
      %s173 = scalar_lea.vmem %s0, %s172
      %p174 = scmp.lt.s32.totalorder %s15, 1
      %s175 = scalar_select %p174, %s15, 1
      %s176 = smul.addr %s175, 3
      %s177 = smul.addr %s176, 4
      %s178 = scalar_lea.vmem %s2, %s177
      %p179 = scmp.lt.s32.totalorder %s15, 1
      %s180 = scalar_select %p179, %s15, 1
      %s181 = smul.addr %s180, 3
      %s182 = smul.addr %s181, 2
      %s183 = scalar_lea.vmem %s3, %s182
      %v186 = vld [vmem:[%s173] sm:$0x3f]
      %v188 = vcombine.high %v186, %v186
      %v190 = vunpack.c.l.s4 1983009808
      %v191 = vunpack.c.0.s8 %v190
      %v192 = vlaneseq
      %v193 = vshrl.u32 %v192, 7
      %v194 = vsub.s32 %v191, %v193
      %v195 = vrot.slane %v186, %v194
      %v197 = vunpack.c.l.s4 1983009808
      %v198 = vunpack.c.0.s8 %v197
      %v199 = vlaneseq
      %v200 = vshrl.u32 %v199, 7
      %v201 = vsub.s32 %v198, %v200
      %v202 = vrot.slane %v188, %v201
      %205 = vst [vmem:[#allocation2] sm:$0x33] %v195
      %vm206 = vcmask 254976
      %207 = vst.msk [vmem:[#allocation2 + $0x8] sm:$0x3] %vm206, %v202
      %v208 = vld [vmem:[%s173] sm:$0x3f]
      %v210 = vcombine.low %v208, %v208
      %v212 = vunpack.c.l.s4 1983009808
      %v213 = vunpack.c.0.s8 %v212
      %v214 = vlaneseq
      %v215 = vshrl.u32 %v214, 7
      %v216 = vsub.s32 %v213, %v215
      %v217 = vrot.slane %v210, %v216
      %v219 = vunpack.c.l.s4 1983009808
      %v220 = vunpack.c.0.s8 %v219
      %v221 = vlaneseq
      %v222 = vshrl.u32 %v221, 7
      %v223 = vsub.s32 %v220, %v222
      %v224 = vrot.slane %v208, %v223
      %225 = vrot.lane.b32.xlu0 %v217, 127
      %v226 = vpop.permute.xlu0 %225
      %227 = vrot.lane.b32.xlu0 %v224, 127
      %v228 = vpop.permute.xlu0 %227
      %v229 = vrot.slane %v226, 4
      %v230 = vrot.slane %v228, 4
      %vm231 = vcmask 1043456
      %v232 = vsel %vm231, %v229, %v230
      %vm233 = vcmask 1039360
      %v234 = vsel %vm233, %v226, %v232
      %237 = vst [vmem:[#allocation2] sm:$0xcc] %v234
      %vm238 = vcmask 257026
      %239 = vst.msk [vmem:[#allocation2 + $0x8] sm:$0xc] %vm238, %v228
      %v240 = vld [vmem:[%s173] sm:$0x3f]
      %v242 = vcombine.high %v240, %v240
      %v244 = vunpack.c.l.s4 1983009808
      %v245 = vunpack.c.0.s8 %v244
      %v246 = vlaneseq
      %v247 = vshrl.u32 %v246, 7
      %v248 = vsub.s32 %v245, %v247
      %v249 = vrot.slane %v240, %v248
      %v251 = vunpack.c.l.s4 1983009808
      %v252 = vunpack.c.0.s8 %v251
      %v253 = vlaneseq
      %v254 = vshrl.u32 %v253, 7
      %v255 = vsub.s32 %v252, %v254
      %v256 = vrot.slane %v242, %v255
      %257 = vrot.lane.b32.xlu0 %v249, 126
      %v258 = vpop.permute.xlu0 %257
      %259 = vrot.lane.b32.xlu0 %v256, 126
      %v260 = vpop.permute.xlu0 %259
      %v261 = vrot.slane %v258, 4
      %v262 = vrot.slane %v260, 4
      %v263 = vsel %vm231, %v261, %v262
      %vm264 = vcmask 1031168
      %v265 = vsel %vm264, %v258, %v263
      %268 = vst [vmem:[#allocation2 + $0xc] sm:$0x33] %v265
      %269 = vst.msk [vmem:[#allocation2 + $0x14] sm:$0x3] %vm206, %v260
      %v270 = vld [vmem:[%s173] sm:$0x3f]
      %v272 = vcombine.low %v270, %v270
      %v274 = vunpack.c.l.s4 1983009808
      %v275 = vunpack.c.0.s8 %v274
      %v276 = vlaneseq
      %v277 = vshrl.u32 %v276, 7
      %v278 = vsub.s32 %v275, %v277
      %v279 = vrot.slane %v272, %v278
      %v281 = vunpack.c.l.s4 1983009808
      %v282 = vunpack.c.0.s8 %v281
      %v283 = vlaneseq
      %v284 = vshrl.u32 %v283, 7
      %v285 = vsub.s32 %v282, %v284
      %v286 = vrot.slane %v270, %v285
      %287 = vrot.lane.b32.xlu0 %v279, 110
      %v288 = vpop.permute.xlu0 %287
      %289 = vrot.lane.b32.xlu0 %v286, 110
      %v290 = vpop.permute.xlu0 %289
      %v291 = vrot.slane %v288, 4
      %v292 = vrot.slane %v290, 4
      %v293 = vsel %vm231, %v291, %v292
      %vm294 = vcmask 900096
      %v295 = vsel %vm294, %v288, %v293
      %298 = vst [vmem:[#allocation2 + $0xc] sm:$0xcc] %v295
      %299 = vst.msk [vmem:[#allocation2 + $0x14] sm:$0xc] %vm238, %v290
      %v300 = vld [vmem:[%s173] sm:$0x3f]
      %v302 = vcombine.high %v300, %v300
      %v304 = vunpack.c.l.s4 1983009808
      %v305 = vunpack.c.0.s8 %v304
      %v306 = vlaneseq
      %v307 = vshrl.u32 %v306, 7
      %v308 = vsub.s32 %v305, %v307
      %v309 = vrot.slane %v300, %v308
      %v311 = vunpack.c.l.s4 1983009808
      %v312 = vunpack.c.0.s8 %v311
      %v313 = vlaneseq
      %v314 = vshrl.u32 %v313, 7
      %v315 = vsub.s32 %v312, %v314
      %v316 = vrot.slane %v302, %v315
      %317 = vrot.lane.b32.xlu0 %v309, 109
      %v318 = vpop.permute.xlu0 %317
      %319 = vrot.lane.b32.xlu0 %v316, 109
      %v320 = vpop.permute.xlu0 %319
      %v321 = vrot.slane %v318, 4
      %v322 = vrot.slane %v320, 4
      %v323 = vsel %vm231, %v321, %v322
      %vm324 = vcmask 891904
      %v325 = vsel %vm324, %v318, %v323
      %328 = vst [vmem:[#allocation2 + $0x18] sm:$0x33] %v325
      %329 = vst.msk [vmem:[#allocation2 + $0x20] sm:$0x3] %vm206, %v320
      %v330 = vld [vmem:[%s173] sm:$0x3f]
      %v332 = vcombine.low %v330, %v330
      %v334 = vunpack.c.l.s4 1983009808
      %v335 = vunpack.c.0.s8 %v334
      %v336 = vlaneseq
      %v337 = vshrl.u32 %v336, 7
      %v338 = vsub.s32 %v335, %v337
      %v339 = vrot.slane %v332, %v338
      %v341 = vunpack.c.l.s4 1983009808
      %v342 = vunpack.c.0.s8 %v341
      %v343 = vlaneseq
      %v344 = vshrl.u32 %v343, 7
      %v345 = vsub.s32 %v342, %v344
      %v346 = vrot.slane %v330, %v345
      %347 = vrot.lane.b32.xlu0 %v339, 108
      %v348 = vpop.permute.xlu0 %347
      %349 = vrot.lane.b32.xlu0 %v346, 108
      %v350 = vpop.permute.xlu0 %349
      %v351 = vrot.slane %v348, 4
      %v352 = vrot.slane %v350, 4
      %v353 = vsel %vm231, %v351, %v352
      %vm354 = vcmask 883712
      %v355 = vsel %vm354, %v348, %v353
      %358 = vst [vmem:[#allocation2 + $0x18] sm:$0xcc] %v355
      %359 = vst.msk [vmem:[#allocation2 + $0x20] sm:$0xc] %vm238, %v350
      %v360 = vld [vmem:[%s173] sm:$0x3f]
      %v362 = vcombine.high %v360, %v360
      %v364 = vunpack.c.l.s4 1983009808
      %v365 = vunpack.c.0.s8 %v364
      %v366 = vlaneseq
      %v367 = vshrl.u32 %v366, 7
      %v368 = vsub.s32 %v365, %v367
      %v369 = vrot.slane %v360, %v368
      %v371 = vunpack.c.l.s4 1983009808
      %v372 = vunpack.c.0.s8 %v371
      %v373 = vlaneseq
      %v374 = vshrl.u32 %v373, 7
      %v375 = vsub.s32 %v372, %v374
      %v376 = vrot.slane %v362, %v375
      %377 = vrot.lane.b32.xlu0 %v369, 92
      %v378 = vpop.permute.xlu0 %377
      %379 = vrot.lane.b32.xlu0 %v376, 92
      %v380 = vpop.permute.xlu0 %379
      %v381 = vrot.slane %v378, 4
      %v382 = vrot.slane %v380, 4
      %v383 = vsel %vm231, %v381, %v382
      %vm384 = vcmask 752640
      %v385 = vsel %vm384, %v378, %v383
      %388 = vst [vmem:[#allocation2 + $0x24] sm:$0x33] %v385
      %389 = vst.msk [vmem:[#allocation2 + $0x2c] sm:$0x3] %vm206, %v380
      %v390 = vld [vmem:[%s173] sm:$0x3f]
      %v392 = vcombine.low %v390, %v390
      %v394 = vunpack.c.l.s4 1983009808
      %v395 = vunpack.c.0.s8 %v394
      %v396 = vlaneseq
      %v397 = vshrl.u32 %v396, 7
      %v398 = vsub.s32 %v395, %v397
      %v399 = vrot.slane %v392, %v398
      %v401 = vunpack.c.l.s4 1983009808
      %v402 = vunpack.c.0.s8 %v401
      %v403 = vlaneseq
      %v404 = vshrl.u32 %v403, 7
      %v405 = vsub.s32 %v402, %v404
      %v406 = vrot.slane %v390, %v405
      %407 = vrot.lane.b32.xlu0 %v399, 91
      %v408 = vpop.permute.xlu0 %407
      %409 = vrot.lane.b32.xlu0 %v406, 91
      %v410 = vpop.permute.xlu0 %409
      %v411 = vrot.slane %v408, 4
      %v412 = vrot.slane %v410, 4
      %v413 = vsel %vm231, %v411, %v412
      %vm414 = vcmask 744448
      %v415 = vsel %vm414, %v408, %v413
      %418 = vst [vmem:[#allocation2 + $0x24] sm:$0xcc] %v415
      %419 = vst.msk [vmem:[#allocation2 + $0x2c] sm:$0xc] %vm238, %v410
      %v420 = vld [vmem:[%s173] sm:$0x3f]
      %v422 = vcombine.high %v420, %v420
      %v424 = vunpack.c.l.s4 1983009808
      %v425 = vunpack.c.0.s8 %v424
      %v426 = vlaneseq
      %v427 = vshrl.u32 %v426, 7
      %v428 = vsub.s32 %v425, %v427
      %v429 = vrot.slane %v420, %v428
      %v431 = vunpack.c.l.s4 1983009808
      %v432 = vunpack.c.0.s8 %v431
      %v433 = vlaneseq
      %v434 = vshrl.u32 %v433, 7
      %v435 = vsub.s32 %v432, %v434
      %v436 = vrot.slane %v422, %v435
      %437 = vrot.lane.b32.xlu0 %v429, 90
      %v438 = vpop.permute.xlu0 %437
      %439 = vrot.lane.b32.xlu0 %v436, 90
      %v440 = vpop.permute.xlu0 %439
      %v441 = vrot.slane %v438, 4
      %v442 = vrot.slane %v440, 4
      %v443 = vsel %vm231, %v441, %v442
      %vm444 = vcmask 736256
      %v445 = vsel %vm444, %v438, %v443
      %448 = vst [vmem:[#allocation2 + $0x30] sm:$0x33] %v445
      %449 = vst.msk [vmem:[#allocation2 + $0x38] sm:$0x3] %vm206, %v440
      %vm450 = vcmask 1042434
      %vm451 = vsmask.f32 2304
      %vm452 = vmand %vm450, %vm451
      %vm453 = vcmask 1046534
      %vm454 = vsmask.f32 6400
      %vm455 = vmand %vm453, %vm454
      %vm456 = vmor %vm455, %vm452
      %v457 = vld [vmem:[#allocation2 + $0x30] sm:$0x44]
      %v458 = vsel %vm456, 1065369472, %v457
      %459 = vst [vmem:[#allocation2 + $0x30] sm:$0x44] %v458
      %vm460 = vcmask 256002
      %vm461 = vmand %vm460, %vm451
      %v462 = vld [vmem:[#allocation2 + $0x38] sm:$0x4]
      %v463 = vsel %vm461, 1065369472, %v462
      %464 = vst [vmem:[#allocation2 + $0x38] sm:$0x4] %v463
      %v465 = vld [vmem:[%s1] sm:$0xf]
      %v466 = vld [vmem:[%s1 + $0x4] sm:$0x3]
      %v467 = vld [vmem:[#allocation2] sm:$0xff]
      %v468 = vld [vmem:[#allocation2 + $0x8] sm:$0xf]
      %v469 = vld [vmem:[#allocation2 + $0xc] sm:$0xff]
      %v470 = vld [vmem:[#allocation2 + $0x14] sm:$0xf]
      %v471 = vld [vmem:[#allocation2 + $0x18] sm:$0xff]
      %v472 = vld [vmem:[#allocation2 + $0x20] sm:$0xf]
      %v473 = vld [vmem:[#allocation2 + $0x24] sm:$0xff]
      %v474 = vld [vmem:[#allocation2 + $0x2c] sm:$0xf]
      %v475 = vld [vmem:[#allocation2 + $0x30] sm:$0x77]
      %v476 = vld [vmem:[#allocation2 + $0x38] sm:$0x7]
      %v479 = vunpack.c.l.b16 %v465
      %v480 = vunpack.c.l.b16 %v466
      %v481 = vpack.c.b16 %v480, %v479
      %v492 = vunpack.c.l.b16 %v467
      %v493 = vunpack.c.h.b16 %v467
      %v494 = vunpack.c.l.b16 %v468
      %v495 = vunpack.c.l.b16 %v469
      %v496 = vunpack.c.h.b16 %v469
      %v497 = vunpack.c.l.b16 %v470
      %v498 = vunpack.c.l.b16 %v471
      %v499 = vunpack.c.h.b16 %v471
      %v500 = vunpack.c.l.b16 %v472
      %v501 = vunpack.c.l.b16 %v473
      %v502 = vunpack.c.h.b16 %v473
      %v503 = vunpack.c.l.b16 %v474
      %v504 = vunpack.c.l.b16 %v475
      %v505 = vunpack.c.h.b16 %v475
      %v506 = vunpack.c.l.b16 %v476
      %v507 = vpack.c.b16 %v495, %v492
      %v508 = vpack.c.b16 %v496, %v493
      %v509 = vpack.c.b16 %v497, %v494
      %v510 = vpack.c.b16 %v501, %v498
      %v511 = vpack.c.b16 %v502, %v499
      %v512 = vpack.c.b16 %v503, %v500
      %v513 = vpack.c.b16 %v504, %v504
      %v514 = vpack.c.b16 %v505, %v505
      %v515 = vpack.c.b16 %v506, %v506
      %vm522 = vcmask 302080
      %v524 = vsel %vm522, %v481, 0
      %vm526 = vcmask 1041408
      %vm527 = vcmask 1042432
      %v528 = vsel %vm526, 4294967295, 65535
      %v529 = vsel %vm527, %v528, 0
      %v531 = vand.u32 %v513, %v529
      %v534 = vand.u32 %v514, %v529
      %v537 = vand.u32 %v515, %v529
      %539 = vmatprep.subr.bf16.mxu0 %v508
      %540 = vmatpush1.bf16.msra.mxu0 %v507
      %541 = vmatprep.subr.bf16.mxu0 %v511
      %542 = vmatpush1.bf16.msra.mxu0 %v510
      %543 = vmatprep.subr.bf16.mxu0 %v534
      %544 = vmatpush1.bf16.msra.mxu0 %v531
      %545 = vmatprep.subr.bf16.mxu0 0
      %546 = vmatpush1.bf16.msra.mxu0 0
      %547 = vmatprep.subr.bf16.mxu0 0
      %548 = vmatpush1.bf16.msra.mxu0 0
      %549 = vmatprep.subr.bf16.mxu0 0
      %550 = vmatpush1.bf16.msra.mxu0 0
      %551 = vmatprep.subr.bf16.mxu0 0
      %552 = vmatpush1.bf16.msra.mxu0 0
      %553 = vmatprep.subr.bf16.mxu0 0
      %554 = vmatpush1.bf16.msra.mxu0 0
      %555 = vmatprep.subr.bf16.mxu0 0
      %556 = vmatpush1.bf16.msra.mxu0 0
      %557 = vmatprep.subr.bf16.mxu0 0
      %558 = vmatpush1.bf16.msra.mxu0 0
      %559 = vmatprep.subr.bf16.mxu0 0
      %560 = vmatpush1.bf16.msra.mxu0 0
      %561 = vmatprep.subr.bf16.mxu0 0
      %562 = vmatpush1.bf16.msra.mxu0 0
      %563 = vmatprep.subr.bf16.mxu0 0
      %564 = vmatpush1.bf16.msra.mxu0 0
      %565 = vmatprep.subr.bf16.mxu0 0
      %566 = vmatpush1.bf16.msra.mxu0 0
      %567 = vmatprep.subr.bf16.mxu0 0
      %568 = vmatpush1.bf16.msra.mxu0 0
      %569 = vmatprep.subr.bf16.mxu0 0
      %570 = vmatpush1.bf16.msra.mxu0 0
      %571 = vmatprep.mubr.bf16.mxu0 0
      %572 = vmatmul.mubr.bf16.gmra.mrb[0].mxu0 %v524
      %v573 = vpop.f32.mrb[0].mxu0
      %v574 = vadd.f32 0.0, %v573
      %v575 = vpop.f32.mrb[0].mxu0
      %v576 = vadd.f32 0.0, %v575
      %v577 = vpop.f32.mrb[0].mxu0
      %v578 = vadd.f32 0.0, %v577
      %v579 = vpop.f32.mrb[0].mxu0
      %v580 = vadd.f32 0.0, %v579
      %581 = vdwg.mxu0
      %582 = vmatprep.subr.bf16.mxu0 0
      %583 = vmatpush1.bf16.msra.mxu0 %v509
      %584 = vmatprep.subr.bf16.mxu0 0
      %585 = vmatpush1.bf16.msra.mxu0 %v512
      %586 = vmatprep.subr.bf16.mxu0 0
      %587 = vmatpush1.bf16.msra.mxu0 %v537
      %588 = vmatprep.subr.bf16.mxu0 0
      %589 = vmatpush1.bf16.msra.mxu0 0
      %590 = vmatprep.subr.bf16.mxu0 0
      %591 = vmatpush1.bf16.msra.mxu0 0
      %592 = vmatprep.subr.bf16.mxu0 0
      %593 = vmatpush1.bf16.msra.mxu0 0
      %594 = vmatprep.subr.bf16.mxu0 0
      %595 = vmatpush1.bf16.msra.mxu0 0
      %596 = vmatprep.subr.bf16.mxu0 0
      %597 = vmatpush1.bf16.msra.mxu0 0
      %598 = vmatprep.subr.bf16.mxu0 0
      %599 = vmatpush1.bf16.msra.mxu0 0
      %600 = vmatprep.subr.bf16.mxu0 0
      %601 = vmatpush1.bf16.msra.mxu0 0
      %602 = vmatprep.subr.bf16.mxu0 0
      %603 = vmatpush1.bf16.msra.mxu0 0
      %604 = vmatprep.subr.bf16.mxu0 0
      %605 = vmatpush1.bf16.msra.mxu0 0
      %606 = vmatprep.subr.bf16.mxu0 0
      %607 = vmatpush1.bf16.msra.mxu0 0
      %608 = vmatprep.subr.bf16.mxu0 0
      %609 = vmatpush1.bf16.msra.mxu0 0
      %610 = vmatprep.subr.bf16.mxu0 0
      %611 = vmatpush1.bf16.msra.mxu0 0
      %612 = vmatprep.subr.bf16.mxu0 0
      %613 = vmatpush1.bf16.msra.mxu0 0
      %614 = vmatprep.mubr.bf16.mxu0 0
      %615 = vmatmul.mubr.bf16.gmra.mrb[0].mxu0 %v524
      %v616 = vpop.f32.mrb[0].mxu0
      %v617 = vadd.f32 0.0, %v616
      %v618 = vpop.f32.mrb[0].mxu0
      %v619 = vpop.f32.mrb[0].mxu0
      %v620 = vadd.f32 0.0, %v619
      %v621 = vpop.f32.mrb[0].mxu0
      %622 = vdwg.mxu0
      %v623 = vpack.c.bf16 %v574, %v574
      %v624 = vpack.c.bf16 %v576, %v576
      %v625 = vpack.c.bf16 %v617, %v617
      %v629 = vunpack.c.l.b16 %v623
      %v630 = vunpack.c.l.b16 %v624
      %v631 = vunpack.c.l.b16 %v625
      %v632 = vpack.c.b16 %v630, %v629
      %v633 = vpack.c.b16 %v631, %v631
      %636 = vst [vmem:[%s178] sm:$0xff] %v632
      %vm637 = vcmask 257024
      %638 = vst.msk [vmem:[%s178 + $0x8] sm:$0xf] %vm637, %v633
      %v639 = vpack.c.bf16 %v578, %v578
      %v640 = vpack.c.bf16 %v580, %v580
      %v641 = vpack.c.bf16 %v620, %v620
      %v645 = vcombine.low %v639, %v640
      %v647 = vunpack.c.l.s4 1983009808
      %v648 = vunpack.c.0.s8 %v647
      %v649 = vlaneseq
      %v650 = vshrl.u32 %v649, 7
      %v651 = vsub.s32 %v648, %v650
      %v652 = vrot.slane %v645, %v651
      %v654 = vunpack.c.l.s4 1983009808
      %v655 = vunpack.c.0.s8 %v654
      %v656 = vlaneseq
      %v657 = vshrl.u32 %v656, 7
      %v658 = vsub.s32 %v655, %v657
      %v659 = vrot.slane %v641, %v658
      %v660 = vcombine.low %v652, %v659
      %vm662 = vcmask 1043458
      %vm663 = vmor %vm662, %vm526
      %vm664 = vcmask 259076
      %vm665 = vmor %vm664, %vm663
      %666 = vst.msk [vmem:[%s183] sm:$0x3f] %vm665, %v660
      %p667 = scmp.lt.s32.totalorder %s15, 1
      %s668 = scalar_select %p667, %s15, 1
      %s669 = smul.addr %s668, 3
      %s670 = smul.addr %s669, 4
      %s671 = scalar_lea.vmem %s2, %s670
      %p672 = scmp.lt.s32.totalorder %s15, 1
      %s673 = scalar_select %p672, %s15, 1
      %s674 = smul.addr %s673, 3
      %s675 = smul.addr %s674, 2
      %s676 = scalar_lea.vmem %s3, %s675
      // Predicated region
      $region29: #{dla_wrapper_forward.1} parent=27 // pred_check
        %p677 = pneg %p80
      $region30: #{dla_wrapper_forward.1} parent=27 // pred_check_branch
        %679 = sbr.rel (%p677) target = $region32
      $region31: #{dla_wrapper_forward.1} parent=27 // pred_region
        _
      $region32: #{dla_wrapper_forward.1} parent=27 // pred_fallthru
        _
      // Predicated region
      $region33: #{dla_wrapper_forward.1} parent=27 // pred_check
        %p680 = pneg %p106
      $region34: #{dla_wrapper_forward.1} parent=27 // pred_check_branch
        %682 = sbr.rel (%p680) target = $region36
      $region35: #{dla_wrapper_forward.1} parent=27 // pred_region
        _
      $region36: #{dla_wrapper_forward.1} parent=27 // pred_fallthru
        _
    $region28: #{dla_wrapper_forward.1} parent=5 // pred_fallthru
      _
    %p683 = scmp.le.s32.totalorder 2, %s10
    // Predicated region
    $region37: #{dla_wrapper_forward.1} parent=5 // pred_check
      %p684 = pneg %p683
    $region38: #{dla_wrapper_forward.1} parent=5 // pred_check_branch
      %686 = sbr.rel (%p684) target = $region40
    $region39: #{dla_wrapper_forward.1} parent=5 // pred_region
      %s687 = ssub.s32 %s10, 2
      // Predicated region
      $region41: #{dla_wrapper_forward.1} parent=39 // pred_check
        %p688 = pneg %p86
      $region42: #{dla_wrapper_forward.1} parent=39 // pred_check_branch
        %690 = sbr.rel (%p688) target = $region44
      $region43: #{dla_wrapper_forward.1} parent=39 // pred_region
        %p691 = scmp.lt.s32.totalorder %s16, 1
        %s692 = scalar_select %p691, %s16, 1
        %s693 = smul.addr %s692, 3
        %s694 = smul.addr %s693, 4
        %s695 = scalar_lea.vmem %s2, %s694
      $region44: #{dla_wrapper_forward.1} parent=39 // pred_fallthru
        _
      // Predicated region
      $region45: #{dla_wrapper_forward.1} parent=39 // pred_check
        %p696 = pneg %p112
      $region46: #{dla_wrapper_forward.1} parent=39 // pred_check_branch
        %698 = sbr.rel (%p696) target = $region48
      $region47: #{dla_wrapper_forward.1} parent=39 // pred_region
        %p699 = scmp.lt.s32.totalorder %s16, 1
        %s700 = scalar_select %p699, %s16, 1
        %s701 = smul.addr %s700, 3
        %s702 = smul.addr %s701, 2
        %s703 = scalar_lea.vmem %s3, %s702
      $region48: #{dla_wrapper_forward.1} parent=39 // pred_fallthru
        _
    $region40: #{dla_wrapper_forward.1} parent=5 // pred_fallthru
      _
  $region6: #{dla_wrapper_forward.1} parent=0 // loop_footer
    %s14 = sadd.s32 1, %s10
  $region7: #{dla_wrapper_forward.1} parent=0 // loop_footer_branch
    %9 = sbr.rel target = $region3
  $region8: #{dla_wrapper_forward.1} parent=0 // loop_exit
    _

</llo_original>
